<compile_context>
chip_gen: v6e
topology: v6e:2x2x1
jax: 0.10.0
libtpu: 0.0.40
codegen_flags: <defaults>
</compile_context>

<pallas_src>
import jax
import jax.numpy as jnp
from jax import lax
from jax.experimental import pallas as pl
from jax.experimental.pallas import tpu as pltpu


def _round_up(n, m):
    return ((n + m - 1) // m) * m


def _largest_divisor_leq(n, cap):
    for d in range(min(n, cap), 0, -1):
        if n % d == 0:
            return d
    return 1


def rul_rnn_kernel(x_ref, wih_ref, whh_ref, b_ref, wl_ref, bl_ref, y_ref,
                   h_ref, xproj_ref):
    # x_ref:     (chunk, bt, F)  seq-major input block for this (batch, time) tile
    # wih_ref:   (F, Hp)         padded W_ih^T
    # whh_ref:   (Hp, Hp)        padded W_hh^T
    # b_ref:     (1, Hp)         padded (b_ih + b_hh)
    # wl_ref:    (1, Hp)         padded W_lin (as a row)
    # bl_ref:    (1, 1)          b_lin
    # y_ref:     (bt, 1)         output block, written on the last time chunk
    # h_ref:     (bt, Hp)        hidden state, persists across time chunks
    # xproj_ref: (chunk*bt, Hp)  hoisted input projection for this chunk
    t = pl.program_id(1)
    chunk, bt, F = x_ref.shape

    @pl.when(t == 0)
    def _init():
        h_ref[...] = jnp.zeros_like(h_ref)

    # ---- Time-parallel input projection: one big MXU matmul per chunk, with
    #      the RNN bias broadcast folded in once (outside the serial loop).
    x_flat = x_ref[...].reshape(chunk * bt, F)
    xproj_ref[...] = (
        jnp.dot(x_flat, wih_ref[...], preferred_element_type=jnp.float32)
        + b_ref[...]
    )

    # ---- Serial recurrence: per step only  h @ W_hh^T + add + tanh.
    def step(s, h):
        off = pl.multiple_of(s * bt, bt)
        pre = xproj_ref[pl.ds(off, bt), :] + jnp.dot(
            h, whh_ref[...], preferred_element_type=jnp.float32)
        return jnp.tanh(pre)

    h_ref[...] = lax.fori_loop(0, chunk, step, h_ref[...],
                               unroll=min(chunk, 8))

    # ---- Final linear (output width 1): VPU multiply + lane reduce instead of
    #      a degenerate (Hp, 1) MXU call.  Only on the last time chunk.
    @pl.when(t == pl.num_programs(1) - 1)
    def _finalize():
        y = jnp.sum(h_ref[...] * wl_ref[...], axis=-1, keepdims=True) + bl_ref[...]
        y_ref[...] = y.astype(y_ref.dtype)


def rul_rnn_forward(x, params, *, time_chunk=128, batch_tile=128):
    """x: (B, S, F) float32, batch_first like the PyTorch module. Returns (B, 1)."""
    w_ih = params["w_ih"]    # (H, F)
    w_hh = params["w_hh"]    # (H, H)
    b_ih = params["b_ih"]    # (H,)
    b_hh = params["b_hh"]    # (H,)
    w_lin = params["w_lin"]  # (1, H)
    b_lin = params["b_lin"]  # (1,)

    B, S, F = x.shape
    H = w_hh.shape[0]

    # ---- Hardware-friendly padding (lanes = 128, sublanes = 8).
    Hp = _round_up(max(H, 128), 128)
    if B <= batch_tile:
        Bp = _round_up(max(B, 8), 8)
        bt = Bp
    else:
        Bp = _round_up(B, batch_tile)
        bt = batch_tile
    # The time chunk must divide S exactly (zero-padding time would change the math).
    chunk = _largest_divisor_leq(S, time_chunk)
    nb = Bp // bt
    nt = S // chunk

    f32 = jnp.float32
    # TODO(synk): for large workloads store x / weights in bfloat16 (keep f32
    # accumulation) to halve DMA bytes; kept f32 here to match PyTorch numerics.
    x_sm = jnp.transpose(x, (1, 0, 2)).astype(f32)                  # (S, B, F)
    x_sm = jnp.pad(x_sm, ((0, 0), (0, Bp - B), (0, 0)))             # (S, Bp, F)
    wih_t = jnp.pad(jnp.transpose(w_ih).astype(f32),
                    ((0, 0), (0, Hp - H)))                          # (F, Hp)
    whh_t = jnp.pad(jnp.transpose(w_hh).astype(f32),
                    ((0, Hp - H), (0, Hp - H)))                     # (Hp, Hp)
    b = jnp.pad((b_ih + b_hh).astype(f32), (0, Hp - H)).reshape(1, Hp)
    wl = jnp.pad(w_lin.astype(f32), ((0, 0), (0, Hp - H)))          # (1, Hp)
    bl = b_lin.reshape(1, 1).astype(f32)                            # (1, 1)

    # ---- Explicit VMEM budget (portable to v7x's 64 MiB VMEM).
    by = 4
    vmem_need = (
        2 * chunk * bt * F * by                         # x block (double-buffered)
        + 2 * (F * Hp + Hp * Hp + 3 * Hp + 1) * by      # weights / biases
        + (bt * Hp + chunk * bt * Hp) * by              # h + xproj scratch
        + 2 * bt * by                                   # output block
    )
    vmem_limit = int(min(48 * 1024 * 1024, max(2 * vmem_need, 2 * 1024 * 1024)))

    grid_spec = pltpu.PrefetchScalarGridSpec(
        num_scalar_prefetch=0,
        grid=(nb, nt),
        in_specs=[
            pl.BlockSpec((chunk, bt, F), lambda b_, t_: (t_, b_, 0)),
            pl.BlockSpec((F, Hp), lambda b_, t_: (0, 0)),
            pl.BlockSpec((Hp, Hp), lambda b_, t_: (0, 0)),
            pl.BlockSpec((1, Hp), lambda b_, t_: (0, 0)),
            pl.BlockSpec((1, Hp), lambda b_, t_: (0, 0)),
            pl.BlockSpec((1, 1), lambda b_, t_: (0, 0)),
        ],
        out_specs=pl.BlockSpec((bt, 1), lambda b_, t_: (b_, 0)),
        scratch_shapes=[
            pltpu.VMEM((bt, Hp), jnp.float32),           # hidden state carry
            pltpu.VMEM((chunk * bt, Hp), jnp.float32),   # hoisted input projection
        ],
    )

    y_pad = pl.pallas_call(
        rul_rnn_kernel,
        out_shape=jax.ShapeDtypeStruct((Bp, 1), jnp.float32),
        grid_spec=grid_spec,
        compiler_params=pltpu.CompilerParams(
            dimension_semantics=("parallel", "arbitrary"),
            vmem_limit_bytes=vmem_limit,
        ),
    )(x_sm, wih_t, whh_t, b, wl, bl)

    return y_pad[:B]


def init_params(key, fea_num, hid_size):
    """Deterministic init matching PyTorch nn.RNN / nn.Linear shapes."""
    k = 1.0 / jnp.sqrt(jnp.float32(hid_size))
    keys = jax.random.split(key, 6)
    return {
        "w_ih": jax.random.uniform(keys[0], (hid_size, fea_num), jnp.float32, -k, k),
        "w_hh": jax.random.uniform(keys[1], (hid_size, hid_size), jnp.float32, -k, k),
        "b_ih": jax.random.uniform(keys[2], (hid_size,), jnp.float32, -k, k),
        "b_hh": jax.random.uniform(keys[3], (hid_size,), jnp.float32, -k, k),
        "w_lin": jax.random.uniform(keys[4], (1, hid_size), jnp.float32, -k, k),
        "b_lin": jax.random.uniform(keys[5], (1,), jnp.float32, -k, k),
    }


def rul_rnn_reference(x, params):
    """Pure-JAX reference of the same forward pass (sanity check)."""
    B, S, F = x.shape
    H = params["w_hh"].shape[0]
    h = jnp.zeros((B, H), jnp.float32)
    for t in range(S):
        pre = (x[:, t, :] @ params["w_ih"].T + params["b_ih"]
               + h @ params["w_hh"].T + params["b_hh"])
        h = jnp.tanh(pre)
    return h @ params["w_lin"].T + params["b_lin"]


if __name__ == "__main__":
    batch, seq_len, fea_num, hid_size = 2, 8, 4, 32

    key = jax.random.PRNGKey(0)
    kx, kp = jax.random.split(key)
    x = jax.random.normal(kx, (batch, seq_len, fea_num), jnp.float32)
    params = init_params(kp, fea_num, hid_size)

    y = rul_rnn_forward(x, params)
    y = jax.block_until_ready(y)

    y_ref = rul_rnn_reference(x, params)
    assert y.shape == (batch, 1)
    assert jnp.allclose(y, y_ref, atol=1e-5, rtol=1e-5)

    print("KERNEL_OK")
</pallas_src>

<mosaic_0001>
module attributes {stable_mosaic.version = 11 : i64} {
  func.func @rul_rnn_kernel(%arg0: i32, %arg1: i32, %arg2: memref<8x8x4xf32, #tpu.memory_space<vmem>>, %arg3: memref<4x128xf32, #tpu.memory_space<vmem>>, %arg4: memref<128x128xf32, #tpu.memory_space<vmem>>, %arg5: memref<1x128xf32, #tpu.memory_space<vmem>>, %arg6: memref<1x128xf32, #tpu.memory_space<vmem>>, %arg7: memref<1x1xf32, #tpu.memory_space<vmem>>, %arg8: memref<8x1xf32, #tpu.memory_space<vmem>>, %arg9: memref<8x128xf32, #tpu.memory_space<vmem>>, %arg10: memref<64x128xf32, #tpu.memory_space<vmem>>) attributes {dimension_semantics = [#tpu.dimension_semantics<parallel>, #tpu.dimension_semantics<arbitrary>], iteration_bounds = array<i64: 1, 1>, scalar_prefetch = 0 : i64, scratch_operands = 2 : i64, tpu.core_type = #tpu.core_type<tc>, window_params = [{transform_indices = @transform_0, window_bounds = array<i64: 8, 8, 4>}, {pipeline_mode = #tpu.pipeline_mode<synchronous>, transform_indices = @transform_1, window_bounds = array<i64: 4, 128>}, {pipeline_mode = #tpu.pipeline_mode<synchronous>, transform_indices = @transform_2, window_bounds = array<i64: 128, 128>}, {pipeline_mode = #tpu.pipeline_mode<synchronous>, transform_indices = @transform_3, window_bounds = array<i64: 1, 128>}, {pipeline_mode = #tpu.pipeline_mode<synchronous>, transform_indices = @transform_4, window_bounds = array<i64: 1, 128>}, {pipeline_mode = #tpu.pipeline_mode<synchronous>, transform_indices = @transform_5, window_bounds = array<i64: 1, 1>}, {transform_indices = @transform_6, window_bounds = array<i64: 8, 1>}]} {
    %c0_i32 = arith.constant 0 : i32
    %0 = arith.cmpi eq, %arg1, %c0_i32 : i32
    %1 = arith.extui %0 : i1 to i32
    %c0_i32_0 = arith.constant 0 : i32
    %2 = arith.cmpi ne, %1, %c0_i32_0 : i32
    scf.if %2 {
      %cst_56 = arith.constant 0.000000e+00 : f32
      %80 = vector.broadcast %cst_56 : f32 to vector<8x128xf32>
      %c0_57 = arith.constant 0 : index
      %c0_58 = arith.constant 0 : index
      %81 = vector.load %arg9[%c0_57, %c0_58] : memref<8x128xf32, #tpu.memory_space<vmem>>, vector<8x128xf32>
      tpu.vector_store %arg9[%c0_57, %c0_58], %80 {strides = array<i32>} : memref<8x128xf32, #tpu.memory_space<vmem>>, vector<8x128xf32>,
    } else {
    }
    %c0 = arith.constant 0 : index
    %c0_1 = arith.constant 0 : index
    %c0_2 = arith.constant 0 : index
    %3 = vector.load %arg2[%c0, %c0_1, %c0_2] : memref<8x8x4xf32, #tpu.memory_space<vmem>>, vector<8x8x4xf32>
    %4 = vector.shape_cast %3 : vector<8x8x4xf32> to vector<64x4xf32>
    %c0_3 = arith.constant 0 : index
    %c0_4 = arith.constant 0 : index
    %5 = vector.load %arg3[%c0_3, %c0_4] : memref<4x128xf32, #tpu.memory_space<vmem>>, vector<4x128xf32>
    %cst = arith.constant dense<0.000000e+00> : vector<64x128xf32>
    %6 = tpu.matmul %4, %5, %cst {dimension_numbers = #tpu.dot_dimension_numbers<[1], [0], [0], [1], [0, 0, 1, 1], [], []>} : vector<64x4xf32>, vector<4x128xf32>, vector<64x128xf32> -> vector<64x128xf32>
    %c0_5 = arith.constant 0 : index
    %c0_6 = arith.constant 0 : index
    %7 = vector.load %arg5[%c0_5, %c0_6] : memref<1x128xf32, #tpu.memory_space<vmem>>, vector<1x128xf32>
    %8 = vector.broadcast %7 : vector<1x128xf32> to vector<64x128xf32>
    %9 = arith.addf %6, %8 : vector<64x128xf32>
    %c0_7 = arith.constant 0 : index
    %c0_8 = arith.constant 0 : index
    %10 = vector.load %arg10[%c0_7, %c0_8] : memref<64x128xf32, #tpu.memory_space<vmem>>, vector<64x128xf32>
    tpu.vector_store %arg10[%c0_7, %c0_8], %9 {strides = array<i32>} : memref<64x128xf32, #tpu.memory_space<vmem>>, vector<64x128xf32>,
    %c0_9 = arith.constant 0 : index
    %c0_10 = arith.constant 0 : index
    %11 = vector.load %arg9[%c0_9, %c0_10] : memref<8x128xf32, #tpu.memory_space<vmem>>, vector<8x128xf32>
    %c0_i32_11 = arith.constant 0 : i32
    %c8_i32 = arith.constant 8 : i32
    %12 = arith.muli %c0_i32_11, %c8_i32 : i32
    %13 = tpu.assume_multiple %12, 8 : i32
    %14 = arith.index_cast %13 : i32 to index
    %c0_12 = arith.constant 0 : index
    %15 = vector.load %arg10[%14, %c0_12] : memref<64x128xf32, #tpu.memory_space<vmem>>, vector<8x128xf32>
    %c0_13 = arith.constant 0 : index
    %c0_14 = arith.constant 0 : index
    %16 = vector.load %arg4[%c0_13, %c0_14] : memref<128x128xf32, #tpu.memory_space<vmem>>, vector<128x128xf32>
    %cst_15 = arith.constant dense<0.000000e+00> : vector<8x128xf32>
    %17 = tpu.matmul %11, %16, %cst_15 {dimension_numbers = #tpu.dot_dimension_numbers<[1], [0], [0], [1], [0, 0, 1, 1], [], []>} : vector<8x128xf32>, vector<128x128xf32>, vector<8x128xf32> -> vector<8x128xf32>
    %18 = arith.addf %15, %17 : vector<8x128xf32>
    %19 = math.tanh %18 : vector<8x128xf32>
    %c1_i32 = arith.constant 1 : i32
    %c8_i32_16 = arith.constant 8 : i32
    %20 = arith.muli %c1_i32, %c8_i32_16 : i32
    %21 = tpu.assume_multiple %20, 8 : i32
    %22 = arith.index_cast %21 : i32 to index
    %c0_17 = arith.constant 0 : index
    %23 = vector.load %arg10[%22, %c0_17] : memref<64x128xf32, #tpu.memory_space<vmem>>, vector<8x128xf32>
    %c0_18 = arith.constant 0 : index
    %c0_19 = arith.constant 0 : index
    %24 = vector.load %arg4[%c0_18, %c0_19] : memref<128x128xf32, #tpu.memory_space<vmem>>, vector<128x128xf32>
    %cst_20 = arith.constant dense<0.000000e+00> : vector<8x128xf32>
    %25 = tpu.matmul %19, %24, %cst_20 {dimension_numbers = #tpu.dot_dimension_numbers<[1], [0], [0], [1], [0, 0, 1, 1], [], []>} : vector<8x128xf32>, vector<128x128xf32>, vector<8x128xf32> -> vector<8x128xf32>
    %26 = arith.addf %23, %25 : vector<8x128xf32>
    %27 = math.tanh %26 : vector<8x128xf32>
    %c2_i32 = arith.constant 2 : i32
    %c8_i32_21 = arith.constant 8 : i32
    %28 = arith.muli %c2_i32, %c8_i32_21 : i32
    %29 = tpu.assume_multiple %28, 8 : i32
    %30 = arith.index_cast %29 : i32 to index
    %c0_22 = arith.constant 0 : index
    %31 = vector.load %arg10[%30, %c0_22] : memref<64x128xf32, #tpu.memory_space<vmem>>, vector<8x128xf32>
    %c0_23 = arith.constant 0 : index
    %c0_24 = arith.constant 0 : index
    %32 = vector.load %arg4[%c0_23, %c0_24] : memref<128x128xf32, #tpu.memory_space<vmem>>, vector<128x128xf32>
    %cst_25 = arith.constant dense<0.000000e+00> : vector<8x128xf32>
    %33 = tpu.matmul %27, %32, %cst_25 {dimension_numbers = #tpu.dot_dimension_numbers<[1], [0], [0], [1], [0, 0, 1, 1], [], []>} : vector<8x128xf32>, vector<128x128xf32>, vector<8x128xf32> -> vector<8x128xf32>
    %34 = arith.addf %31, %33 : vector<8x128xf32>
    %35 = math.tanh %34 : vector<8x128xf32>
    %c3_i32 = arith.constant 3 : i32
    %c8_i32_26 = arith.constant 8 : i32
    %36 = arith.muli %c3_i32, %c8_i32_26 : i32
    %37 = tpu.assume_multiple %36, 8 : i32
    %38 = arith.index_cast %37 : i32 to index
    %c0_27 = arith.constant 0 : index
    %39 = vector.load %arg10[%38, %c0_27] : memref<64x128xf32, #tpu.memory_space<vmem>>, vector<8x128xf32>
    %c0_28 = arith.constant 0 : index
    %c0_29 = arith.constant 0 : index
    %40 = vector.load %arg4[%c0_28, %c0_29] : memref<128x128xf32, #tpu.memory_space<vmem>>, vector<128x128xf32>
    %cst_30 = arith.constant dense<0.000000e+00> : vector<8x128xf32>
    %41 = tpu.matmul %35, %40, %cst_30 {dimension_numbers = #tpu.dot_dimension_numbers<[1], [0], [0], [1], [0, 0, 1, 1], [], []>} : vector<8x128xf32>, vector<128x128xf32>, vector<8x128xf32> -> vector<8x128xf32>
    %42 = arith.addf %39, %41 : vector<8x128xf32>
    %43 = math.tanh %42 : vector<8x128xf32>
    %c4_i32 = arith.constant 4 : i32
    %c8_i32_31 = arith.constant 8 : i32
    %44 = arith.muli %c4_i32, %c8_i32_31 : i32
    %45 = tpu.assume_multiple %44, 8 : i32
    %46 = arith.index_cast %45 : i32 to index
    %c0_32 = arith.constant 0 : index
    %47 = vector.load %arg10[%46, %c0_32] : memref<64x128xf32, #tpu.memory_space<vmem>>, vector<8x128xf32>
    %c0_33 = arith.constant 0 : index
    %c0_34 = arith.constant 0 : index
    %48 = vector.load %arg4[%c0_33, %c0_34] : memref<128x128xf32, #tpu.memory_space<vmem>>, vector<128x128xf32>
    %cst_35 = arith.constant dense<0.000000e+00> : vector<8x128xf32>
    %49 = tpu.matmul %43, %48, %cst_35 {dimension_numbers = #tpu.dot_dimension_numbers<[1], [0], [0], [1], [0, 0, 1, 1], [], []>} : vector<8x128xf32>, vector<128x128xf32>, vector<8x128xf32> -> vector<8x128xf32>
    %50 = arith.addf %47, %49 : vector<8x128xf32>
    %51 = math.tanh %50 : vector<8x128xf32>
    %c5_i32 = arith.constant 5 : i32
    %c8_i32_36 = arith.constant 8 : i32
    %52 = arith.muli %c5_i32, %c8_i32_36 : i32
    %53 = tpu.assume_multiple %52, 8 : i32
    %54 = arith.index_cast %53 : i32 to index
    %c0_37 = arith.constant 0 : index
    %55 = vector.load %arg10[%54, %c0_37] : memref<64x128xf32, #tpu.memory_space<vmem>>, vector<8x128xf32>
    %c0_38 = arith.constant 0 : index
    %c0_39 = arith.constant 0 : index
    %56 = vector.load %arg4[%c0_38, %c0_39] : memref<128x128xf32, #tpu.memory_space<vmem>>, vector<128x128xf32>
    %cst_40 = arith.constant dense<0.000000e+00> : vector<8x128xf32>
    %57 = tpu.matmul %51, %56, %cst_40 {dimension_numbers = #tpu.dot_dimension_numbers<[1], [0], [0], [1], [0, 0, 1, 1], [], []>} : vector<8x128xf32>, vector<128x128xf32>, vector<8x128xf32> -> vector<8x128xf32>
    %58 = arith.addf %55, %57 : vector<8x128xf32>
    %59 = math.tanh %58 : vector<8x128xf32>
    %c6_i32 = arith.constant 6 : i32
    %c8_i32_41 = arith.constant 8 : i32
    %60 = arith.muli %c6_i32, %c8_i32_41 : i32
    %61 = tpu.assume_multiple %60, 8 : i32
    %62 = arith.index_cast %61 : i32 to index
    %c0_42 = arith.constant 0 : index
    %63 = vector.load %arg10[%62, %c0_42] : memref<64x128xf32, #tpu.memory_space<vmem>>, vector<8x128xf32>
    %c0_43 = arith.constant 0 : index
    %c0_44 = arith.constant 0 : index
    %64 = vector.load %arg4[%c0_43, %c0_44] : memref<128x128xf32, #tpu.memory_space<vmem>>, vector<128x128xf32>
    %cst_45 = arith.constant dense<0.000000e+00> : vector<8x128xf32>
    %65 = tpu.matmul %59, %64, %cst_45 {dimension_numbers = #tpu.dot_dimension_numbers<[1], [0], [0], [1], [0, 0, 1, 1], [], []>} : vector<8x128xf32>, vector<128x128xf32>, vector<8x128xf32> -> vector<8x128xf32>
    %66 = arith.addf %63, %65 : vector<8x128xf32>
    %67 = math.tanh %66 : vector<8x128xf32>
    %c7_i32 = arith.constant 7 : i32
    %c8_i32_46 = arith.constant 8 : i32
    %68 = arith.muli %c7_i32, %c8_i32_46 : i32
    %69 = tpu.assume_multiple %68, 8 : i32
    %70 = arith.index_cast %69 : i32 to index
    %c0_47 = arith.constant 0 : index
    %71 = vector.load %arg10[%70, %c0_47] : memref<64x128xf32, #tpu.memory_space<vmem>>, vector<8x128xf32>
    %c0_48 = arith.constant 0 : index
    %c0_49 = arith.constant 0 : index
    %72 = vector.load %arg4[%c0_48, %c0_49] : memref<128x128xf32, #tpu.memory_space<vmem>>, vector<128x128xf32>
    %cst_50 = arith.constant dense<0.000000e+00> : vector<8x128xf32>
    %73 = tpu.matmul %67, %72, %cst_50 {dimension_numbers = #tpu.dot_dimension_numbers<[1], [0], [0], [1], [0, 0, 1, 1], [], []>} : vector<8x128xf32>, vector<128x128xf32>, vector<8x128xf32> -> vector<8x128xf32>
    %74 = arith.addf %71, %73 : vector<8x128xf32>
    %75 = math.tanh %74 : vector<8x128xf32>
    %c8_i32_51 = arith.constant 8 : i32
    %c0_52 = arith.constant 0 : index
    %c0_53 = arith.constant 0 : index
    %76 = vector.load %arg9[%c0_52, %c0_53] : memref<8x128xf32, #tpu.memory_space<vmem>>, vector<8x128xf32>
    tpu.vector_store %arg9[%c0_52, %c0_53], %75 {strides = array<i32>} : memref<8x128xf32, #tpu.memory_space<vmem>>, vector<8x128xf32>,
    %c0_i32_54 = arith.constant 0 : i32
    %77 = arith.cmpi eq, %arg1, %c0_i32_54 : i32
    %78 = arith.extui %77 : i1 to i32
    %c0_i32_55 = arith.constant 0 : i32
    %79 = arith.cmpi ne, %78, %c0_i32_55 : i32
    scf.if %79 {
      %c0_56 = arith.constant 0 : index
      %c0_57 = arith.constant 0 : index
      %80 = vector.load %arg9[%c0_56, %c0_57] : memref<8x128xf32, #tpu.memory_space<vmem>>, vector<8x128xf32>
      %c0_58 = arith.constant 0 : index
      %c0_59 = arith.constant 0 : index
      %81 = vector.load %arg6[%c0_58, %c0_59] : memref<1x128xf32, #tpu.memory_space<vmem>>, vector<1x128xf32>
      %82 = vector.broadcast %81 : vector<1x128xf32> to vector<8x128xf32>
      %83 = arith.mulf %80, %82 : vector<8x128xf32>
      %cst_60 = arith.constant dense<0.000000e+00> : vector<8xf32>
      %84 = vector.multi_reduction <add>, %83, %cst_60 [1] : vector<8x128xf32> to vector<8xf32>
      %85 = vector.shape_cast %84 : vector<8xf32> to vector<8x1xf32>
      %c0_61 = arith.constant 0 : index
      %c0_62 = arith.constant 0 : index
      %86 = vector.load %arg7[%c0_61, %c0_62] : memref<1x1xf32, #tpu.memory_space<vmem>>, vector<1x1xf32>
      %87 = vector.broadcast %86 : vector<1x1xf32> to vector<8x1xf32>
      %88 = arith.addf %85, %87 : vector<8x1xf32>
      %c0_63 = arith.constant 0 : index
      %c0_64 = arith.constant 0 : index
      %89 = vector.load %arg8[%c0_63, %c0_64] : memref<8x1xf32, #tpu.memory_space<vmem>>, vector<8x1xf32>
      tpu.vector_store %arg8[%c0_63, %c0_64], %88 {strides = array<i32>} : memref<8x1xf32, #tpu.memory_space<vmem>>, vector<8x1xf32>,
    } else {
    }
    return
  }
  func.func @transform_0(%arg0: i32, %arg1: i32) -> (i32, i32, i32) {
    %c0_i32 = arith.constant 0 : i32
    %c0_i32_0 = arith.constant 0 : i32
    return %arg1, %arg0, %c0_i32 : i32, i32, i32
  }
  func.func @transform_1(%arg0: i32, %arg1: i32) -> (i32, i32) {
    %c0_i32 = arith.constant 0 : i32
    %c0_i32_0 = arith.constant 0 : i32
    %c0_i32_1 = arith.constant 0 : i32
    return %c0_i32, %c0_i32_0 : i32, i32
  }
  func.func @transform_2(%arg0: i32, %arg1: i32) -> (i32, i32) {
    %c0_i32 = arith.constant 0 : i32
    %c0_i32_0 = arith.constant 0 : i32
    %c0_i32_1 = arith.constant 0 : i32
    return %c0_i32, %c0_i32_0 : i32, i32
  }
  func.func @transform_3(%arg0: i32, %arg1: i32) -> (i32, i32) {
    %c0_i32 = arith.constant 0 : i32
    %c0_i32_0 = arith.constant 0 : i32
    %c0_i32_1 = arith.constant 0 : i32
    return %c0_i32, %c0_i32_0 : i32, i32
  }
  func.func @transform_4(%arg0: i32, %arg1: i32) -> (i32, i32) {
    %c0_i32 = arith.constant 0 : i32
    %c0_i32_0 = arith.constant 0 : i32
    %c0_i32_1 = arith.constant 0 : i32
    return %c0_i32, %c0_i32_0 : i32, i32
  }
  func.func @transform_5(%arg0: i32, %arg1: i32) -> (i32, i32) {
    %c0_i32 = arith.constant 0 : i32
    %c0_i32_0 = arith.constant 0 : i32
    %c0_i32_1 = arith.constant 0 : i32
    return %c0_i32, %c0_i32_0 : i32, i32
  }
  func.func @transform_6(%arg0: i32, %arg1: i32) -> (i32, i32) {
    %c0_i32 = arith.constant 0 : i32
    %c0_i32_0 = arith.constant 0 : i32
    return %arg0, %c0_i32 : i32, i32
  }
}

</mosaic_0001>

<llo_original>
// kernel: tpu_custom_call.1
$region0: #{tpu_custom_call.1}
  #allocation0 [shape = 'u32[]', space=smem, size = 0x4, offset = 0x4, fixed_abs, tag = 'smem constant byte address 0x4 - core index']
  #allocation1 [shape = 'u32[144,128]{1,0:T(1,128)}', space=vmem, size = 0x12000, scoped, tag = 'internal scratch']
  #allocation2 [shape = 'f32[8,128]{1,0:T(8,128)}', space=vmem, size = 0x1000, scoped, tag = 'scratch operand']
  #allocation3 [shape = 'f32[64,128]{1,0:T(8,128)}', space=vmem, size = 0x8000, scoped, tag = 'scratch operand']
  #allocation4 [shape = 'f32[1,1]{1,0:T(1,128)S(1)}', space=vmem, size = 0x200, scoped, tag = 'scoped memory for tpu_custom_call.1']
  %s0 = inlined_call_operand.vmem [shape: f32[8,8,4], index: 0, kind: input, shape index: {}]
  %s1 = inlined_call_operand.vmem [shape: f32[4,128], index: 1, kind: input, shape index: {}]
  %s2 = inlined_call_operand.hbm [shape: f32[128,128], index: 2, kind: input, shape index: {}]
  %s3 = inlined_call_operand.vmem [shape: f32[1,128], index: 3, kind: input, shape index: {}]
  %s4 = inlined_call_operand.vmem [shape: f32[1,128], index: 4, kind: input, shape index: {}]
  %s5 = inlined_call_operand.<no memory space> [shape: f32[1,1], index: 5, kind: input, shape index: {}]
  %s6 = inlined_call_operand.vmem [shape: f32[8,1], index: 6, kind: output, shape index: {}]
  %s7 = sld [smem:[#allocation0]]
  $region46: #{tpu_custom_call.1} parent=0
    _
  %s9 = ssub.s32 1, %s7
  %s10 = scalar_select 0, %s9, %s7
  %v11 = vstv %s5
  %12 = vst [vmem:[#allocation4] sm:$0x1] %v11
  $region1: #{tpu_custom_call.1} parent=0
    #allocation5 [shape = 'u8[65536]{0}', space=vmem, size = 0x10000, scoped, tag = 'input window, operand 2, single buffered']
    #allocation6 [shape = 's32[1]{0}', space=sflag, size = 0x4, scoped, tag = 'scoped memory for tpu_custom_call.1']
    %13 = vsyncpa [#allocation6], 0
    // Predicated region
    $region2: #{tpu_custom_call.1} parent=1 // pred_check
      _
    $region3: #{tpu_custom_call.1} parent=1 // pred_check_branch
      %15 = sbr.rel (0) target = $region5
    $region4: #{tpu_custom_call.1} parent=1 // pred_region
      _
    $region5: #{tpu_custom_call.1} parent=1 // pred_fallthru
      _
    // Predicated region
    $region6: #{tpu_custom_call.1} parent=1 // pred_check
      _
    $region7: #{tpu_custom_call.1} parent=1 // pred_check_branch
      %17 = sbr.rel (0) target = $region9
    $region8: #{tpu_custom_call.1} parent=1 // pred_region
      _
    $region9: #{tpu_custom_call.1} parent=1 // pred_fallthru
      _
    // Predicated region
    $region10: #{tpu_custom_call.1} parent=1 // pred_check
      _
    $region11: #{tpu_custom_call.1} parent=1 // pred_check_branch
      %19 = sbr.rel (0) target = $region13
    $region12: #{tpu_custom_call.1} parent=1 // pred_region
      %s21 = ssub.s32 2048, 2048
      %22 = vsyncadd [#allocation6], %s21
      %s23 = sshll.u32 [#allocation5], 4
      %s24 = int_to_ptr.vmem [resolvable:$true] %s23
      %29 = dma.hbm_to_vmem [thread:$0]  %s2, 2048, %s24, [#allocation6], 128, 128, 8
    $region13: #{tpu_custom_call.1} parent=1 // pred_fallthru
      _
    // Predicated region
    $region14: #{tpu_custom_call.1} parent=1 // pred_check
      _
    $region15: #{tpu_custom_call.1} parent=1 // pred_check_branch
      %31 = sbr.rel (0) target = $region17
    $region16: #{tpu_custom_call.1} parent=1 // pred_region
      _
    $region17: #{tpu_custom_call.1} parent=1 // pred_fallthru
      _
    // Predicated region
    $region18: #{tpu_custom_call.1} parent=1 // pred_check
      _
    $region19: #{tpu_custom_call.1} parent=1 // pred_check_branch
      %33 = sbr.rel (0) target = $region21
    $region20: #{tpu_custom_call.1} parent=1 // pred_region
      _
    $region21: #{tpu_custom_call.1} parent=1 // pred_fallthru
      _
    // Predicated region
    $region22: #{tpu_custom_call.1} parent=1 // pred_check
      _
    $region23: #{tpu_custom_call.1} parent=1 // pred_check_branch
      %35 = sbr.rel (0) target = $region25
    $region24: #{tpu_custom_call.1} parent=1 // pred_region
      _
    $region25: #{tpu_custom_call.1} parent=1 // pred_fallthru
      _
    // Predicated region
    $region26: #{tpu_custom_call.1} parent=1 // pred_check
      _
    $region27: #{tpu_custom_call.1} parent=1 // pred_check_branch
      %37 = sbr.rel (0) target = $region29
    $region28: #{tpu_custom_call.1} parent=1 // pred_region
      %38 = dma.done [#allocation6], 2048
    $region29: #{tpu_custom_call.1} parent=1 // pred_fallthru
      _
    %p39 = scmp.eq.s32.totalorder 0, 0
    // Predicated region
    $region30: #{tpu_custom_call.1} parent=1 // pred_check
      %p40 = pneg %p39
    $region31: #{tpu_custom_call.1} parent=1 // pred_check_branch
      %42 = sbr.rel (%p40) target = $region33
    $region32: #{tpu_custom_call.1} parent=1 // pred_region
      %43 = vst [vmem:[#allocation2] sm:$0xff] 0.0
    $region33: #{tpu_custom_call.1} parent=1 // pred_fallthru
      _
    %v44 = vld [vmem:[%s0] sm:$0xff]
    %v45 = vld [vmem:[%s0 + $0x8] sm:$0xff]
    %v46 = vld [vmem:[%s0 + $0x10] sm:$0xff]
    %v47 = vld [vmem:[%s0 + $0x18] sm:$0xff]
    %v48 = vld [vmem:[%s0 + $0x20] sm:$0xff]
    %v49 = vld [vmem:[%s0 + $0x28] sm:$0xff]
    %v50 = vld [vmem:[%s0 + $0x30] sm:$0xff]
    %v51 = vld [vmem:[%s0 + $0x38] sm:$0xff]
    %v52 = vld [vmem:[%s1] sm:$0xf]
    %v53 = vld [vmem:[%s3] sm:$0x1]
    %v55 = vlaneseq
    %v56 = vshrl.u32 %v55, 7
    %v57 = vsub.s32 0, %v56
    %v58 = vrot.slane %v53, %v57
    %vm60 = vcmask 31744
    %v62 = vsel %vm60, %v44, 0
    %v65 = vsel %vm60, %v45, 0
    %v68 = vsel %vm60, %v46, 0
    %v71 = vsel %vm60, %v47, 0
    %v74 = vsel %vm60, %v48, 0
    %v77 = vsel %vm60, %v49, 0
    %v80 = vsel %vm60, %v50, 0
    %v83 = vsel %vm60, %v51, 0
    %vm85 = vcmask 1043456
    %v87 = vsel %vm85, %v52, 0
    %89 = vmatprep.subr.mxu0 0.0
    %90 = vmatpush1.msra.mxu0 0.0
    %91 = vmatprep.subr.mxu0 0.0
    %92 = vmatpush1.msra.mxu0 0.0
    %93 = vmatprep.subr.mxu0 0.0
    %94 = vmatpush1.msra.mxu0 0.0
    %95 = vmatprep.subr.mxu0 0.0
    %96 = vmatpush1.msra.mxu0 0.0
    %97 = vmatprep.subr.mxu0 0.0
    %98 = vmatpush1.msra.mxu0 0.0
    %99 = vmatprep.subr.mxu0 0.0
    %100 = vmatpush1.msra.mxu0 0.0
    %101 = vmatprep.subr.mxu0 0.0
    %102 = vmatpush1.msra.mxu0 0.0
    %103 = vmatprep.subr.mxu0 0.0
    %104 = vmatpush1.msra.mxu0 0.0
    %105 = vmatprep.subr.mxu0 0.0
    %106 = vmatpush1.msra.mxu0 0.0
    %107 = vmatprep.subr.mxu0 0.0
    %108 = vmatpush1.msra.mxu0 0.0
    %109 = vmatprep.subr.mxu0 0.0
    %110 = vmatpush1.msra.mxu0 0.0
    %111 = vmatprep.subr.mxu0 0.0
    %112 = vmatpush1.msra.mxu0 0.0
    %113 = vmatprep.subr.mxu0 0.0
    %114 = vmatpush1.msra.mxu0 0.0
    %115 = vmatprep.subr.mxu0 0.0
    %116 = vmatpush1.msra.mxu0 0.0
    %117 = vmatprep.subr.mxu0 0.0
    %118 = vmatpush1.msra.mxu0 0.0
    %119 = vmatprep.subr.mxu0 0.0
    %120 = vmatpush1.msra.mxu0 %v87
    %121 = vmatprep.subr.mxu0 0.0
    %122 = vmatpush2.msra.mxu0 0.0
    %123 = vmatprep.subr.mxu0 0.0
    %124 = vmatpush2.msra.mxu0 0.0
    %125 = vmatprep.subr.mxu0 0.0
    %126 = vmatpush2.msra.mxu0 0.0
    %127 = vmatprep.subr.mxu0 0.0
    %128 = vmatpush2.msra.mxu0 0.0
    %129 = vmatprep.subr.mxu0 0.0
    %130 = vmatpush2.msra.mxu0 0.0
    %131 = vmatprep.subr.mxu0 0.0
    %132 = vmatpush2.msra.mxu0 0.0
    %133 = vmatprep.subr.mxu0 0.0
    %134 = vmatpush2.msra.mxu0 0.0
    %135 = vmatprep.subr.mxu0 0.0
    %136 = vmatpush2.msra.mxu0 0.0
    %137 = vmatprep.subr.mxu0 0.0
    %138 = vmatpush2.msra.mxu0 0.0
    %139 = vmatprep.subr.mxu0 0.0
    %140 = vmatpush2.msra.mxu0 0.0
    %141 = vmatprep.subr.mxu0 0.0
    %142 = vmatpush2.msra.mxu0 0.0
    %143 = vmatprep.subr.mxu0 0.0
    %144 = vmatpush2.msra.mxu0 0.0
    %145 = vmatprep.subr.mxu0 0.0
    %146 = vmatpush2.msra.mxu0 0.0
    %147 = vmatprep.subr.mxu0 0.0
    %148 = vmatpush2.msra.mxu0 0.0
    %149 = vmatprep.subr.mxu0 0.0
    %150 = vmatpush2.msra.mxu0 0.0
    %151 = vmatprep.subr.mxu0 0.0
    %152 = vmatpush2.msra.mxu0 0.0
    %153 = vmatprep.mubr.f32.mxu0 0.0
    %154 = vmatmul.mubr.f32.gmra.mxu0 %v62
    %v155 = vpop.f32.mrf.mxu0
    %v156 = vadd.f32 %v58, %v155
    %v157 = vpop.f32.mrf.mxu0
    %158 = vmatprep.mubr.f32.mxu0 0.0
    %159 = vmatmul.mubr.f32.gmra.mxu0 %v65
    %v160 = vpop.f32.mrf.mxu0
    %v161 = vadd.f32 %v58, %v160
    %v162 = vpop.f32.mrf.mxu0
    %163 = vmatprep.mubr.f32.mxu0 0.0
    %164 = vmatmul.mubr.f32.gmra.mxu0 %v68
    %v165 = vpop.f32.mrf.mxu0
    %v166 = vadd.f32 %v58, %v165
    %v167 = vpop.f32.mrf.mxu0
    %168 = vmatprep.mubr.f32.mxu0 0.0
    %169 = vmatmul.mubr.f32.gmra.mxu0 %v71
    %v170 = vpop.f32.mrf.mxu0
    %v171 = vadd.f32 %v58, %v170
    %v172 = vpop.f32.mrf.mxu0
    %173 = vmatprep.mubr.f32.mxu0 0.0
    %174 = vmatmul.mubr.f32.gmra.mxu0 %v74
    %v175 = vpop.f32.mrf.mxu0
    %v176 = vadd.f32 %v58, %v175
    %v177 = vpop.f32.mrf.mxu0
    %178 = vmatprep.mubr.f32.mxu0 0.0
    %179 = vmatmul.mubr.f32.gmra.mxu0 %v77
    %v180 = vpop.f32.mrf.mxu0
    %v181 = vadd.f32 %v58, %v180
    %v182 = vpop.f32.mrf.mxu0
    %183 = vmatprep.mubr.f32.mxu0 0.0
    %184 = vmatmul.mubr.f32.gmra.mxu0 %v80
    %v185 = vpop.f32.mrf.mxu0
    %v186 = vadd.f32 %v58, %v185
    %v187 = vpop.f32.mrf.mxu0
    %188 = vmatprep.mubr.f32.mxu0 0.0
    %189 = vmatmul.mubr.f32.gmra.mxu0 %v83
    %v190 = vpop.f32.mrf.mxu0
    %v191 = vadd.f32 %v58, %v190
    %v192 = vpop.f32.mrf.mxu0
    %193 = vdwg.mxu0
    %194 = vst [vmem:[#allocation3] sm:$0xff] %v156
    %195 = vst [vmem:[#allocation3 + $0x8] sm:$0xff] %v161
    %196 = vst [vmem:[#allocation3 + $0x10] sm:$0xff] %v166
    %197 = vst [vmem:[#allocation3 + $0x18] sm:$0xff] %v171
    %198 = vst [vmem:[#allocation3 + $0x20] sm:$0xff] %v176
    %199 = vst [vmem:[#allocation3 + $0x28] sm:$0xff] %v181
    %200 = vst [vmem:[#allocation3 + $0x30] sm:$0xff] %v186
    %201 = vst [vmem:[#allocation3 + $0x38] sm:$0xff] %v191
    %v202 = vld [vmem:[#allocation2] sm:$0xff]
    %v203 = vld [vmem:[#allocation3] sm:$0xff]
    %v204 = vld [vmem:[#allocation5] sm:$0xff]
    %v205 = vld [vmem:[#allocation5 + $0x8] sm:$0xff]
    %v206 = vld [vmem:[#allocation5 + $0x10] sm:$0xff]
    %v207 = vld [vmem:[#allocation5 + $0x18] sm:$0xff]
    %v208 = vld [vmem:[#allocation5 + $0x20] sm:$0xff]
    %v209 = vld [vmem:[#allocation5 + $0x28] sm:$0xff]
    %v210 = vld [vmem:[#allocation5 + $0x30] sm:$0xff]
    %v211 = vld [vmem:[#allocation5 + $0x38] sm:$0xff]
    %v212 = vld [vmem:[#allocation5 + $0x40] sm:$0xff]
    %v213 = vld [vmem:[#allocation5 + $0x48] sm:$0xff]
    %v214 = vld [vmem:[#allocation5 + $0x50] sm:$0xff]
    %v215 = vld [vmem:[#allocation5 + $0x58] sm:$0xff]
    %v216 = vld [vmem:[#allocation5 + $0x60] sm:$0xff]
    %v217 = vld [vmem:[#allocation5 + $0x68] sm:$0xff]
    %v218 = vld [vmem:[#allocation5 + $0x70] sm:$0xff]
    %v219 = vld [vmem:[#allocation5 + $0x78] sm:$0xff]
    %220 = vmatprep.subr.mxu0 0.0
    %221 = vmatpush1.msra.mxu0 %v219
    %222 = vmatprep.subr.mxu0 0.0
    %223 = vmatpush1.msra.mxu0 %v218
    %224 = vmatprep.subr.mxu0 0.0
    %225 = vmatpush1.msra.mxu0 %v217
    %226 = vmatprep.subr.mxu0 0.0
    %227 = vmatpush1.msra.mxu0 %v216
    %228 = vmatprep.subr.mxu0 0.0
    %229 = vmatpush1.msra.mxu0 %v215
    %230 = vmatprep.subr.mxu0 0.0
    %231 = vmatpush1.msra.mxu0 %v214
    %232 = vmatprep.subr.mxu0 0.0
    %233 = vmatpush1.msra.mxu0 %v213
    %234 = vmatprep.subr.mxu0 0.0
    %235 = vmatpush1.msra.mxu0 %v212
    %236 = vmatprep.subr.mxu0 0.0
    %237 = vmatpush1.msra.mxu0 %v211
    %238 = vmatprep.subr.mxu0 0.0
    %239 = vmatpush1.msra.mxu0 %v210
    %240 = vmatprep.subr.mxu0 0.0
    %241 = vmatpush1.msra.mxu0 %v209
    %242 = vmatprep.subr.mxu0 0.0
    %243 = vmatpush1.msra.mxu0 %v208
    %244 = vmatprep.subr.mxu0 0.0
    %245 = vmatpush1.msra.mxu0 %v207
    %246 = vmatprep.subr.mxu0 0.0
    %247 = vmatpush1.msra.mxu0 %v206
    %248 = vmatprep.subr.mxu0 0.0
    %249 = vmatpush1.msra.mxu0 %v205
    %250 = vmatprep.subr.mxu0 0.0
    %251 = vmatpush1.msra.mxu0 %v204
    %252 = vmatprep.subr.mxu0 0.0
    %253 = vmatpush2.msra.mxu0 0.0
    %254 = vmatprep.subr.mxu0 0.0
    %255 = vmatpush2.msra.mxu0 0.0
    %256 = vmatprep.subr.mxu0 0.0
    %257 = vmatpush2.msra.mxu0 0.0
    %258 = vmatprep.subr.mxu0 0.0
    %259 = vmatpush2.msra.mxu0 0.0
    %260 = vmatprep.subr.mxu0 0.0
    %261 = vmatpush2.msra.mxu0 0.0
    %262 = vmatprep.subr.mxu0 0.0
    %263 = vmatpush2.msra.mxu0 0.0
    %264 = vmatprep.subr.mxu0 0.0
    %265 = vmatpush2.msra.mxu0 0.0
    %266 = vmatprep.subr.mxu0 0.0
    %267 = vmatpush2.msra.mxu0 0.0
    %268 = vmatprep.subr.mxu0 0.0
    %269 = vmatpush2.msra.mxu0 0.0
    %270 = vmatprep.subr.mxu0 0.0
    %271 = vmatpush2.msra.mxu0 0.0
    %272 = vmatprep.subr.mxu0 0.0
    %273 = vmatpush2.msra.mxu0 0.0
    %274 = vmatprep.subr.mxu0 0.0
    %275 = vmatpush2.msra.mxu0 0.0
    %276 = vmatprep.subr.mxu0 0.0
    %277 = vmatpush2.msra.mxu0 0.0
    %278 = vmatprep.subr.mxu0 0.0
    %279 = vmatpush2.msra.mxu0 0.0
    %280 = vmatprep.subr.mxu0 0.0
    %281 = vmatpush2.msra.mxu0 0.0
    %282 = vmatprep.subr.mxu0 0.0
    %283 = vmatpush2.msra.mxu0 0.0
    %284 = vmatprep.mubr.f32.mxu0 0.0
    %285 = vmatmul.mubr.f32.gmra.mxu0 %v202
    %v286 = vpop.f32.mrf.mxu0
    %v287 = vadd.f32 0.0, %v286
    %v288 = vpop.f32.mrf.mxu0
    %289 = vdwg.mxu0
    %v290 = vadd.f32 %v203, %v287
    %v291 = vtanh.pop %v290
    %s292 = scalar_lea.vmem [#allocation3], 8
    %v293 = vld [vmem:[%s292] sm:$0xff]
    %294 = vmatprep.subr.mxu0 0.0
    %295 = vmatpush1.msra.mxu0 %v219
    %296 = vmatprep.subr.mxu0 0.0
    %297 = vmatpush1.msra.mxu0 %v218
    %298 = vmatprep.subr.mxu0 0.0
    %299 = vmatpush1.msra.mxu0 %v217
    %300 = vmatprep.subr.mxu0 0.0
    %301 = vmatpush1.msra.mxu0 %v216
    %302 = vmatprep.subr.mxu0 0.0
    %303 = vmatpush1.msra.mxu0 %v215
    %304 = vmatprep.subr.mxu0 0.0
    %305 = vmatpush1.msra.mxu0 %v214
    %306 = vmatprep.subr.mxu0 0.0
    %307 = vmatpush1.msra.mxu0 %v213
    %308 = vmatprep.subr.mxu0 0.0
    %309 = vmatpush1.msra.mxu0 %v212
    %310 = vmatprep.subr.mxu0 0.0
    %311 = vmatpush1.msra.mxu0 %v211
    %312 = vmatprep.subr.mxu0 0.0
    %313 = vmatpush1.msra.mxu0 %v210
    %314 = vmatprep.subr.mxu0 0.0
    %315 = vmatpush1.msra.mxu0 %v209
    %316 = vmatprep.subr.mxu0 0.0
    %317 = vmatpush1.msra.mxu0 %v208
    %318 = vmatprep.subr.mxu0 0.0
    %319 = vmatpush1.msra.mxu0 %v207
    %320 = vmatprep.subr.mxu0 0.0
    %321 = vmatpush1.msra.mxu0 %v206
    %322 = vmatprep.subr.mxu0 0.0
    %323 = vmatpush1.msra.mxu0 %v205
    %324 = vmatprep.subr.mxu0 0.0
    %325 = vmatpush1.msra.mxu0 %v204
    %326 = vmatprep.subr.mxu0 0.0
    %327 = vmatpush2.msra.mxu0 0.0
    %328 = vmatprep.subr.mxu0 0.0
    %329 = vmatpush2.msra.mxu0 0.0
    %330 = vmatprep.subr.mxu0 0.0
    %331 = vmatpush2.msra.mxu0 0.0
    %332 = vmatprep.subr.mxu0 0.0
    %333 = vmatpush2.msra.mxu0 0.0
    %334 = vmatprep.subr.mxu0 0.0
    %335 = vmatpush2.msra.mxu0 0.0
    %336 = vmatprep.subr.mxu0 0.0
    %337 = vmatpush2.msra.mxu0 0.0
    %338 = vmatprep.subr.mxu0 0.0
    %339 = vmatpush2.msra.mxu0 0.0
    %340 = vmatprep.subr.mxu0 0.0
    %341 = vmatpush2.msra.mxu0 0.0
    %342 = vmatprep.subr.mxu0 0.0
    %343 = vmatpush2.msra.mxu0 0.0
    %344 = vmatprep.subr.mxu0 0.0
    %345 = vmatpush2.msra.mxu0 0.0
    %346 = vmatprep.subr.mxu0 0.0
    %347 = vmatpush2.msra.mxu0 0.0
    %348 = vmatprep.subr.mxu0 0.0
    %349 = vmatpush2.msra.mxu0 0.0
    %350 = vmatprep.subr.mxu0 0.0
    %351 = vmatpush2.msra.mxu0 0.0
    %352 = vmatprep.subr.mxu0 0.0
    %353 = vmatpush2.msra.mxu0 0.0
    %354 = vmatprep.subr.mxu0 0.0
    %355 = vmatpush2.msra.mxu0 0.0
    %356 = vmatprep.subr.mxu0 0.0
    %357 = vmatpush2.msra.mxu0 0.0
    %358 = vmatprep.mubr.f32.mxu0 0.0
    %359 = vmatmul.mubr.f32.gmra.mxu0 %v291
    %v360 = vpop.f32.mrf.mxu0
    %v361 = vadd.f32 0.0, %v360
    %v362 = vpop.f32.mrf.mxu0
    %363 = vdwg.mxu0
    %v364 = vadd.f32 %v293, %v361
    %v365 = vtanh.pop %v364
    %s366 = scalar_lea.vmem [#allocation3], 16
    %v367 = vld [vmem:[%s366] sm:$0xff]
    %368 = vmatprep.subr.mxu0 0.0
    %369 = vmatpush1.msra.mxu0 %v219
    %370 = vmatprep.subr.mxu0 0.0
    %371 = vmatpush1.msra.mxu0 %v218
    %372 = vmatprep.subr.mxu0 0.0
    %373 = vmatpush1.msra.mxu0 %v217
    %374 = vmatprep.subr.mxu0 0.0
    %375 = vmatpush1.msra.mxu0 %v216
    %376 = vmatprep.subr.mxu0 0.0
    %377 = vmatpush1.msra.mxu0 %v215
    %378 = vmatprep.subr.mxu0 0.0
    %379 = vmatpush1.msra.mxu0 %v214
    %380 = vmatprep.subr.mxu0 0.0
    %381 = vmatpush1.msra.mxu0 %v213
    %382 = vmatprep.subr.mxu0 0.0
    %383 = vmatpush1.msra.mxu0 %v212
    %384 = vmatprep.subr.mxu0 0.0
    %385 = vmatpush1.msra.mxu0 %v211
    %386 = vmatprep.subr.mxu0 0.0
    %387 = vmatpush1.msra.mxu0 %v210
    %388 = vmatprep.subr.mxu0 0.0
    %389 = vmatpush1.msra.mxu0 %v209
    %390 = vmatprep.subr.mxu0 0.0
    %391 = vmatpush1.msra.mxu0 %v208
    %392 = vmatprep.subr.mxu0 0.0
    %393 = vmatpush1.msra.mxu0 %v207
    %394 = vmatprep.subr.mxu0 0.0
    %395 = vmatpush1.msra.mxu0 %v206
    %396 = vmatprep.subr.mxu0 0.0
    %397 = vmatpush1.msra.mxu0 %v205
    %398 = vmatprep.subr.mxu0 0.0
    %399 = vmatpush1.msra.mxu0 %v204
    %400 = vmatprep.subr.mxu0 0.0
    %401 = vmatpush2.msra.mxu0 0.0
    %402 = vmatprep.subr.mxu0 0.0
    %403 = vmatpush2.msra.mxu0 0.0
    %404 = vmatprep.subr.mxu0 0.0
    %405 = vmatpush2.msra.mxu0 0.0
    %406 = vmatprep.subr.mxu0 0.0
    %407 = vmatpush2.msra.mxu0 0.0
    %408 = vmatprep.subr.mxu0 0.0
    %409 = vmatpush2.msra.mxu0 0.0
    %410 = vmatprep.subr.mxu0 0.0
    %411 = vmatpush2.msra.mxu0 0.0
    %412 = vmatprep.subr.mxu0 0.0
    %413 = vmatpush2.msra.mxu0 0.0
    %414 = vmatprep.subr.mxu0 0.0
    %415 = vmatpush2.msra.mxu0 0.0
    %416 = vmatprep.subr.mxu0 0.0
    %417 = vmatpush2.msra.mxu0 0.0
    %418 = vmatprep.subr.mxu0 0.0
    %419 = vmatpush2.msra.mxu0 0.0
    %420 = vmatprep.subr.mxu0 0.0
    %421 = vmatpush2.msra.mxu0 0.0
    %422 = vmatprep.subr.mxu0 0.0
    %423 = vmatpush2.msra.mxu0 0.0
    %424 = vmatprep.subr.mxu0 0.0
    %425 = vmatpush2.msra.mxu0 0.0
    %426 = vmatprep.subr.mxu0 0.0
    %427 = vmatpush2.msra.mxu0 0.0
    %428 = vmatprep.subr.mxu0 0.0
    %429 = vmatpush2.msra.mxu0 0.0
    %430 = vmatprep.subr.mxu0 0.0
    %431 = vmatpush2.msra.mxu0 0.0
    %432 = vmatprep.mubr.f32.mxu0 0.0
    %433 = vmatmul.mubr.f32.gmra.mxu0 %v365
    %v434 = vpop.f32.mrf.mxu0
    %v435 = vadd.f32 0.0, %v434
    %v436 = vpop.f32.mrf.mxu0
    %437 = vdwg.mxu0
    %v438 = vadd.f32 %v367, %v435
    %v439 = vtanh.pop %v438
    %s440 = scalar_lea.vmem [#allocation3], 24
    %v441 = vld [vmem:[%s440] sm:$0xff]
    %442 = vmatprep.subr.mxu0 0.0
    %443 = vmatpush1.msra.mxu0 %v219
    %444 = vmatprep.subr.mxu0 0.0
    %445 = vmatpush1.msra.mxu0 %v218
    %446 = vmatprep.subr.mxu0 0.0
    %447 = vmatpush1.msra.mxu0 %v217
    %448 = vmatprep.subr.mxu0 0.0
    %449 = vmatpush1.msra.mxu0 %v216
    %450 = vmatprep.subr.mxu0 0.0
    %451 = vmatpush1.msra.mxu0 %v215
    %452 = vmatprep.subr.mxu0 0.0
    %453 = vmatpush1.msra.mxu0 %v214
    %454 = vmatprep.subr.mxu0 0.0
    %455 = vmatpush1.msra.mxu0 %v213
    %456 = vmatprep.subr.mxu0 0.0
    %457 = vmatpush1.msra.mxu0 %v212
    %458 = vmatprep.subr.mxu0 0.0
    %459 = vmatpush1.msra.mxu0 %v211
    %460 = vmatprep.subr.mxu0 0.0
    %461 = vmatpush1.msra.mxu0 %v210
    %462 = vmatprep.subr.mxu0 0.0
    %463 = vmatpush1.msra.mxu0 %v209
    %464 = vmatprep.subr.mxu0 0.0
    %465 = vmatpush1.msra.mxu0 %v208
    %466 = vmatprep.subr.mxu0 0.0
    %467 = vmatpush1.msra.mxu0 %v207
    %468 = vmatprep.subr.mxu0 0.0
    %469 = vmatpush1.msra.mxu0 %v206
    %470 = vmatprep.subr.mxu0 0.0
    %471 = vmatpush1.msra.mxu0 %v205
    %472 = vmatprep.subr.mxu0 0.0
    %473 = vmatpush1.msra.mxu0 %v204
    %474 = vmatprep.subr.mxu0 0.0
    %475 = vmatpush2.msra.mxu0 0.0
    %476 = vmatprep.subr.mxu0 0.0
    %477 = vmatpush2.msra.mxu0 0.0
    %478 = vmatprep.subr.mxu0 0.0
    %479 = vmatpush2.msra.mxu0 0.0
    %480 = vmatprep.subr.mxu0 0.0
    %481 = vmatpush2.msra.mxu0 0.0
    %482 = vmatprep.subr.mxu0 0.0
    %483 = vmatpush2.msra.mxu0 0.0
    %484 = vmatprep.subr.mxu0 0.0
    %485 = vmatpush2.msra.mxu0 0.0
    %486 = vmatprep.subr.mxu0 0.0
    %487 = vmatpush2.msra.mxu0 0.0
    %488 = vmatprep.subr.mxu0 0.0
    %489 = vmatpush2.msra.mxu0 0.0
    %490 = vmatprep.subr.mxu0 0.0
    %491 = vmatpush2.msra.mxu0 0.0
    %492 = vmatprep.subr.mxu0 0.0
    %493 = vmatpush2.msra.mxu0 0.0
    %494 = vmatprep.subr.mxu0 0.0
    %495 = vmatpush2.msra.mxu0 0.0
    %496 = vmatprep.subr.mxu0 0.0
    %497 = vmatpush2.msra.mxu0 0.0
    %498 = vmatprep.subr.mxu0 0.0
    %499 = vmatpush2.msra.mxu0 0.0
    %500 = vmatprep.subr.mxu0 0.0
    %501 = vmatpush2.msra.mxu0 0.0
    %502 = vmatprep.subr.mxu0 0.0
    %503 = vmatpush2.msra.mxu0 0.0
    %504 = vmatprep.subr.mxu0 0.0
    %505 = vmatpush2.msra.mxu0 0.0
    %506 = vmatprep.mubr.f32.mxu0 0.0
    %507 = vmatmul.mubr.f32.gmra.mxu0 %v439
    %v508 = vpop.f32.mrf.mxu0
    %v509 = vadd.f32 0.0, %v508
    %v510 = vpop.f32.mrf.mxu0
    %511 = vdwg.mxu0
    %v512 = vadd.f32 %v441, %v509
    %v513 = vtanh.pop %v512
    %s514 = scalar_lea.vmem [#allocation3], 32
    %v515 = vld [vmem:[%s514] sm:$0xff]
    %516 = vmatprep.subr.mxu0 0.0
    %517 = vmatpush1.msra.mxu0 %v219
    %518 = vmatprep.subr.mxu0 0.0
    %519 = vmatpush1.msra.mxu0 %v218
    %520 = vmatprep.subr.mxu0 0.0
    %521 = vmatpush1.msra.mxu0 %v217
    %522 = vmatprep.subr.mxu0 0.0
    %523 = vmatpush1.msra.mxu0 %v216
    %524 = vmatprep.subr.mxu0 0.0
    %525 = vmatpush1.msra.mxu0 %v215
    %526 = vmatprep.subr.mxu0 0.0
    %527 = vmatpush1.msra.mxu0 %v214
    %528 = vmatprep.subr.mxu0 0.0
    %529 = vmatpush1.msra.mxu0 %v213
    %530 = vmatprep.subr.mxu0 0.0
    %531 = vmatpush1.msra.mxu0 %v212
    %532 = vmatprep.subr.mxu0 0.0
    %533 = vmatpush1.msra.mxu0 %v211
    %534 = vmatprep.subr.mxu0 0.0
    %535 = vmatpush1.msra.mxu0 %v210
    %536 = vmatprep.subr.mxu0 0.0
    %537 = vmatpush1.msra.mxu0 %v209
    %538 = vmatprep.subr.mxu0 0.0
    %539 = vmatpush1.msra.mxu0 %v208
    %540 = vmatprep.subr.mxu0 0.0
    %541 = vmatpush1.msra.mxu0 %v207
    %542 = vmatprep.subr.mxu0 0.0
    %543 = vmatpush1.msra.mxu0 %v206
    %544 = vmatprep.subr.mxu0 0.0
    %545 = vmatpush1.msra.mxu0 %v205
    %546 = vmatprep.subr.mxu0 0.0
    %547 = vmatpush1.msra.mxu0 %v204
    %548 = vmatprep.subr.mxu0 0.0
    %549 = vmatpush2.msra.mxu0 0.0
    %550 = vmatprep.subr.mxu0 0.0
    %551 = vmatpush2.msra.mxu0 0.0
    %552 = vmatprep.subr.mxu0 0.0
    %553 = vmatpush2.msra.mxu0 0.0
    %554 = vmatprep.subr.mxu0 0.0
    %555 = vmatpush2.msra.mxu0 0.0
    %556 = vmatprep.subr.mxu0 0.0
    %557 = vmatpush2.msra.mxu0 0.0
    %558 = vmatprep.subr.mxu0 0.0
    %559 = vmatpush2.msra.mxu0 0.0
    %560 = vmatprep.subr.mxu0 0.0
    %561 = vmatpush2.msra.mxu0 0.0
    %562 = vmatprep.subr.mxu0 0.0
    %563 = vmatpush2.msra.mxu0 0.0
    %564 = vmatprep.subr.mxu0 0.0
    %565 = vmatpush2.msra.mxu0 0.0
    %566 = vmatprep.subr.mxu0 0.0
    %567 = vmatpush2.msra.mxu0 0.0
    %568 = vmatprep.subr.mxu0 0.0
    %569 = vmatpush2.msra.mxu0 0.0
    %570 = vmatprep.subr.mxu0 0.0
    %571 = vmatpush2.msra.mxu0 0.0
    %572 = vmatprep.subr.mxu0 0.0
    %573 = vmatpush2.msra.mxu0 0.0
    %574 = vmatprep.subr.mxu0 0.0
    %575 = vmatpush2.msra.mxu0 0.0
    %576 = vmatprep.subr.mxu0 0.0
    %577 = vmatpush2.msra.mxu0 0.0
    %578 = vmatprep.subr.mxu0 0.0
    %579 = vmatpush2.msra.mxu0 0.0
    %580 = vmatprep.mubr.f32.mxu0 0.0
    %581 = vmatmul.mubr.f32.gmra.mxu0 %v513
    %v582 = vpop.f32.mrf.mxu0
    %v583 = vadd.f32 0.0, %v582
    %v584 = vpop.f32.mrf.mxu0
    %585 = vdwg.mxu0
    %v586 = vadd.f32 %v515, %v583
    %v587 = vtanh.pop %v586
    %s588 = scalar_lea.vmem [#allocation3], 40
    %v589 = vld [vmem:[%s588] sm:$0xff]
    %590 = vmatprep.subr.mxu0 0.0
    %591 = vmatpush1.msra.mxu0 %v219
    %592 = vmatprep.subr.mxu0 0.0
    %593 = vmatpush1.msra.mxu0 %v218
    %594 = vmatprep.subr.mxu0 0.0
    %595 = vmatpush1.msra.mxu0 %v217
    %596 = vmatprep.subr.mxu0 0.0
    %597 = vmatpush1.msra.mxu0 %v216
    %598 = vmatprep.subr.mxu0 0.0
    %599 = vmatpush1.msra.mxu0 %v215
    %600 = vmatprep.subr.mxu0 0.0
    %601 = vmatpush1.msra.mxu0 %v214
    %602 = vmatprep.subr.mxu0 0.0
    %603 = vmatpush1.msra.mxu0 %v213
    %604 = vmatprep.subr.mxu0 0.0
    %605 = vmatpush1.msra.mxu0 %v212
    %606 = vmatprep.subr.mxu0 0.0
    %607 = vmatpush1.msra.mxu0 %v211
    %608 = vmatprep.subr.mxu0 0.0
    %609 = vmatpush1.msra.mxu0 %v210
    %610 = vmatprep.subr.mxu0 0.0
    %611 = vmatpush1.msra.mxu0 %v209
    %612 = vmatprep.subr.mxu0 0.0
    %613 = vmatpush1.msra.mxu0 %v208
    %614 = vmatprep.subr.mxu0 0.0
    %615 = vmatpush1.msra.mxu0 %v207
    %616 = vmatprep.subr.mxu0 0.0
    %617 = vmatpush1.msra.mxu0 %v206
    %618 = vmatprep.subr.mxu0 0.0
    %619 = vmatpush1.msra.mxu0 %v205
    %620 = vmatprep.subr.mxu0 0.0
    %621 = vmatpush1.msra.mxu0 %v204
    %622 = vmatprep.subr.mxu0 0.0
    %623 = vmatpush2.msra.mxu0 0.0
    %624 = vmatprep.subr.mxu0 0.0
    %625 = vmatpush2.msra.mxu0 0.0
    %626 = vmatprep.subr.mxu0 0.0
    %627 = vmatpush2.msra.mxu0 0.0
    %628 = vmatprep.subr.mxu0 0.0
    %629 = vmatpush2.msra.mxu0 0.0
    %630 = vmatprep.subr.mxu0 0.0
    %631 = vmatpush2.msra.mxu0 0.0
    %632 = vmatprep.subr.mxu0 0.0
    %633 = vmatpush2.msra.mxu0 0.0
    %634 = vmatprep.subr.mxu0 0.0
    %635 = vmatpush2.msra.mxu0 0.0
    %636 = vmatprep.subr.mxu0 0.0
    %637 = vmatpush2.msra.mxu0 0.0
    %638 = vmatprep.subr.mxu0 0.0
    %639 = vmatpush2.msra.mxu0 0.0
    %640 = vmatprep.subr.mxu0 0.0
    %641 = vmatpush2.msra.mxu0 0.0
    %642 = vmatprep.subr.mxu0 0.0
    %643 = vmatpush2.msra.mxu0 0.0
    %644 = vmatprep.subr.mxu0 0.0
    %645 = vmatpush2.msra.mxu0 0.0
    %646 = vmatprep.subr.mxu0 0.0
    %647 = vmatpush2.msra.mxu0 0.0
    %648 = vmatprep.subr.mxu0 0.0
    %649 = vmatpush2.msra.mxu0 0.0
    %650 = vmatprep.subr.mxu0 0.0
    %651 = vmatpush2.msra.mxu0 0.0
    %652 = vmatprep.subr.mxu0 0.0
    %653 = vmatpush2.msra.mxu0 0.0
    %654 = vmatprep.mubr.f32.mxu0 0.0
    %655 = vmatmul.mubr.f32.gmra.mxu0 %v587
    %v656 = vpop.f32.mrf.mxu0
    %v657 = vadd.f32 0.0, %v656
    %v658 = vpop.f32.mrf.mxu0
    %659 = vdwg.mxu0
    %v660 = vadd.f32 %v589, %v657
    %v661 = vtanh.pop %v660
    %s662 = scalar_lea.vmem [#allocation3], 48
    %v663 = vld [vmem:[%s662] sm:$0xff]
    %664 = vmatprep.subr.mxu0 0.0
    %665 = vmatpush1.msra.mxu0 %v219
    %666 = vmatprep.subr.mxu0 0.0
    %667 = vmatpush1.msra.mxu0 %v218
    %668 = vmatprep.subr.mxu0 0.0
    %669 = vmatpush1.msra.mxu0 %v217
    %670 = vmatprep.subr.mxu0 0.0
    %671 = vmatpush1.msra.mxu0 %v216
    %672 = vmatprep.subr.mxu0 0.0
    %673 = vmatpush1.msra.mxu0 %v215
    %674 = vmatprep.subr.mxu0 0.0
    %675 = vmatpush1.msra.mxu0 %v214
    %676 = vmatprep.subr.mxu0 0.0
    %677 = vmatpush1.msra.mxu0 %v213
    %678 = vmatprep.subr.mxu0 0.0
    %679 = vmatpush1.msra.mxu0 %v212
    %680 = vmatprep.subr.mxu0 0.0
    %681 = vmatpush1.msra.mxu0 %v211
    %682 = vmatprep.subr.mxu0 0.0
    %683 = vmatpush1.msra.mxu0 %v210
    %684 = vmatprep.subr.mxu0 0.0
    %685 = vmatpush1.msra.mxu0 %v209
    %686 = vmatprep.subr.mxu0 0.0
    %687 = vmatpush1.msra.mxu0 %v208
    %688 = vmatprep.subr.mxu0 0.0
    %689 = vmatpush1.msra.mxu0 %v207
    %690 = vmatprep.subr.mxu0 0.0
    %691 = vmatpush1.msra.mxu0 %v206
    %692 = vmatprep.subr.mxu0 0.0
    %693 = vmatpush1.msra.mxu0 %v205
    %694 = vmatprep.subr.mxu0 0.0
    %695 = vmatpush1.msra.mxu0 %v204
    %696 = vmatprep.subr.mxu0 0.0
    %697 = vmatpush2.msra.mxu0 0.0
    %698 = vmatprep.subr.mxu0 0.0
    %699 = vmatpush2.msra.mxu0 0.0
    %700 = vmatprep.subr.mxu0 0.0
    %701 = vmatpush2.msra.mxu0 0.0
    %702 = vmatprep.subr.mxu0 0.0
    %703 = vmatpush2.msra.mxu0 0.0
    %704 = vmatprep.subr.mxu0 0.0
    %705 = vmatpush2.msra.mxu0 0.0
    %706 = vmatprep.subr.mxu0 0.0
    %707 = vmatpush2.msra.mxu0 0.0
    %708 = vmatprep.subr.mxu0 0.0
    %709 = vmatpush2.msra.mxu0 0.0
    %710 = vmatprep.subr.mxu0 0.0
    %711 = vmatpush2.msra.mxu0 0.0
    %712 = vmatprep.subr.mxu0 0.0
    %713 = vmatpush2.msra.mxu0 0.0
    %714 = vmatprep.subr.mxu0 0.0
    %715 = vmatpush2.msra.mxu0 0.0
    %716 = vmatprep.subr.mxu0 0.0
    %717 = vmatpush2.msra.mxu0 0.0
    %718 = vmatprep.subr.mxu0 0.0
    %719 = vmatpush2.msra.mxu0 0.0
    %720 = vmatprep.subr.mxu0 0.0
    %721 = vmatpush2.msra.mxu0 0.0
    %722 = vmatprep.subr.mxu0 0.0
    %723 = vmatpush2.msra.mxu0 0.0
    %724 = vmatprep.subr.mxu0 0.0
    %725 = vmatpush2.msra.mxu0 0.0
    %726 = vmatprep.subr.mxu0 0.0
    %727 = vmatpush2.msra.mxu0 0.0
    %728 = vmatprep.mubr.f32.mxu0 0.0
    %729 = vmatmul.mubr.f32.gmra.mxu0 %v661
    %v730 = vpop.f32.mrf.mxu0
    %v731 = vadd.f32 0.0, %v730
    %v732 = vpop.f32.mrf.mxu0
    %733 = vdwg.mxu0
    %v734 = vadd.f32 %v663, %v731
    %v735 = vtanh.pop %v734
    %s736 = scalar_lea.vmem [#allocation3], 56
    %v737 = vld [vmem:[%s736] sm:$0xff]
    %738 = vmatprep.subr.mxu0 0.0
    %739 = vmatpush1.msra.mxu0 %v219
    %740 = vmatprep.subr.mxu0 0.0
    %741 = vmatpush1.msra.mxu0 %v218
    %742 = vmatprep.subr.mxu0 0.0
    %743 = vmatpush1.msra.mxu0 %v217
    %744 = vmatprep.subr.mxu0 0.0
    %745 = vmatpush1.msra.mxu0 %v216
    %746 = vmatprep.subr.mxu0 0.0
    %747 = vmatpush1.msra.mxu0 %v215
    %748 = vmatprep.subr.mxu0 0.0
    %749 = vmatpush1.msra.mxu0 %v214
    %750 = vmatprep.subr.mxu0 0.0
    %751 = vmatpush1.msra.mxu0 %v213
    %752 = vmatprep.subr.mxu0 0.0
    %753 = vmatpush1.msra.mxu0 %v212
    %754 = vmatprep.subr.mxu0 0.0
    %755 = vmatpush1.msra.mxu0 %v211
    %756 = vmatprep.subr.mxu0 0.0
    %757 = vmatpush1.msra.mxu0 %v210
    %758 = vmatprep.subr.mxu0 0.0
    %759 = vmatpush1.msra.mxu0 %v209
    %760 = vmatprep.subr.mxu0 0.0
    %761 = vmatpush1.msra.mxu0 %v208
    %762 = vmatprep.subr.mxu0 0.0
    %763 = vmatpush1.msra.mxu0 %v207
    %764 = vmatprep.subr.mxu0 0.0
    %765 = vmatpush1.msra.mxu0 %v206
    %766 = vmatprep.subr.mxu0 0.0
    %767 = vmatpush1.msra.mxu0 %v205
    %768 = vmatprep.subr.mxu0 0.0
    %769 = vmatpush1.msra.mxu0 %v204
    %770 = vmatprep.subr.mxu0 0.0
    %771 = vmatpush2.msra.mxu0 0.0
    %772 = vmatprep.subr.mxu0 0.0
    %773 = vmatpush2.msra.mxu0 0.0
    %774 = vmatprep.subr.mxu0 0.0
    %775 = vmatpush2.msra.mxu0 0.0
    %776 = vmatprep.subr.mxu0 0.0
    %777 = vmatpush2.msra.mxu0 0.0
    %778 = vmatprep.subr.mxu0 0.0
    %779 = vmatpush2.msra.mxu0 0.0
    %780 = vmatprep.subr.mxu0 0.0
    %781 = vmatpush2.msra.mxu0 0.0
    %782 = vmatprep.subr.mxu0 0.0
    %783 = vmatpush2.msra.mxu0 0.0
    %784 = vmatprep.subr.mxu0 0.0
    %785 = vmatpush2.msra.mxu0 0.0
    %786 = vmatprep.subr.mxu0 0.0
    %787 = vmatpush2.msra.mxu0 0.0
    %788 = vmatprep.subr.mxu0 0.0
    %789 = vmatpush2.msra.mxu0 0.0
    %790 = vmatprep.subr.mxu0 0.0
    %791 = vmatpush2.msra.mxu0 0.0
    %792 = vmatprep.subr.mxu0 0.0
    %793 = vmatpush2.msra.mxu0 0.0
    %794 = vmatprep.subr.mxu0 0.0
    %795 = vmatpush2.msra.mxu0 0.0
    %796 = vmatprep.subr.mxu0 0.0
    %797 = vmatpush2.msra.mxu0 0.0
    %798 = vmatprep.subr.mxu0 0.0
    %799 = vmatpush2.msra.mxu0 0.0
    %800 = vmatprep.subr.mxu0 0.0
    %801 = vmatpush2.msra.mxu0 0.0
    %802 = vmatprep.mubr.f32.mxu0 0.0
    %803 = vmatmul.mubr.f32.gmra.mxu0 %v735
    %v804 = vpop.f32.mrf.mxu0
    %v805 = vadd.f32 0.0, %v804
    %v806 = vpop.f32.mrf.mxu0
    %807 = vdwg.mxu0
    %v808 = vadd.f32 %v737, %v805
    %v809 = vtanh.pop %v808
    %810 = vst [vmem:[#allocation2] sm:$0xff] %v809
    // Predicated region
    $region34: #{tpu_custom_call.1} parent=1 // pred_check
      %p811 = pneg %p39
    $region35: #{tpu_custom_call.1} parent=1 // pred_check_branch
      %813 = sbr.rel (%p811) target = $region37
    $region36: #{tpu_custom_call.1} parent=1 // pred_region
      %v814 = vld [vmem:[#allocation2] sm:$0xff]
      %v815 = vld [vmem:[%s4] sm:$0x1]
      %v817 = vlaneseq
      %v818 = vshrl.u32 %v817, 7
      %v819 = vsub.s32 0, %v818
      %v820 = vrot.slane %v815, %v819
      %v822 = vmul.f32 %v814, %v820
      %823 = vadd.xlane.f32.xlu0 %v822
      %v824 = vpop.xlane.xlu0 %823
      %v825 = vld [vmem:[#allocation4] sm:$0x1]
      %v827 = vlaneseq
      %v828 = vshrl.u32 %v827, 7
      %v829 = vsub.s32 0, %v828
      %v830 = vrot.slane %v825, %v829
      %v832 = vadd.f32 %v824, %v830
      %vm833 = vcmask 7168
      %834 = vst.msk [vmem:[%s6] sm:$0xff] %vm833, %v832
    $region37: #{tpu_custom_call.1} parent=1 // pred_fallthru
      _
    // Predicated region
    $region38: #{tpu_custom_call.1} parent=1 // pred_check
      _
    $region39: #{tpu_custom_call.1} parent=1 // pred_check_branch
      %836 = sbr.rel (0) target = $region41
    $region40: #{tpu_custom_call.1} parent=1 // pred_region
      _
    $region41: #{tpu_custom_call.1} parent=1 // pred_fallthru
      _
    // Predicated region
    $region42: #{tpu_custom_call.1} parent=1 // pred_check
      _
    $region43: #{tpu_custom_call.1} parent=1 // pred_check_branch
      %838 = sbr.rel (0) target = $region45
    $region44: #{tpu_custom_call.1} parent=1 // pred_region
      _
    $region45: #{tpu_custom_call.1} parent=1 // pred_fallthru
      _
    %839 = vsyncpa [#allocation6], 1

</llo_original>
